<compile_context>
chip_gen: v6e
topology: v6e:2x2x1
jax: 0.10.0
libtpu: 0.0.40
codegen_flags: <defaults>
</compile_context>

<pallas_src>
import functools
import math

import jax
import jax.numpy as jnp
from jax.experimental import pallas as pl
from jax.experimental.pallas import tpu as pltpu

_MIB = 1024 * 1024


def _round_up(x, n):
    return (x + n - 1) // n * n


def _cdiv(a, b):
    return -(-a // b)


def _chip_config():
    """Per-TPU-generation tile targets and a safe scoped-VMEM ceiling."""
    try:
        kind = jax.devices()[0].device_kind.lower()
    except Exception:  # non-TPU / interpret fallback
        kind = ""
    if "v7" in kind or "7x" in kind:
        # 64 MiB VMEM per TC, 2 TCs/chip, roofline knee ~310 FLOPs/byte.
        return dict(tm=384, th=512, vmem_cap=52 * _MIB, min_m_tiles=2)
    if "v6" in kind:
        # 128 MiB VMEM, knee ~680 FLOPs/byte -> large row tile.
        return dict(tm=768, th=1024, vmem_cap=100 * _MIB, min_m_tiles=1)
    if "v5p" in kind:
        return dict(tm=512, th=1024, vmem_cap=100 * _MIB, min_m_tiles=2)
    if "v5" in kind or "lite" in kind:
        # v5e knee ~240 FLOPs/byte -> tm 256-384 already near compute-bound.
        return dict(tm=384, th=1024, vmem_cap=100 * _MIB, min_m_tiles=1)
    # Unknown chip: conservative config that fits a 64 MiB part.
    return dict(tm=512, th=512, vmem_cap=52 * _MIB, min_m_tiles=1)


def _vmem_budget_bytes(tm, th, d_model, out_itemsize, compute_itemsize):
    """Kernel VMEM working set: double-buffered tiles + acc scratch + f32 h."""
    x_tiles = 2 * tm * d_model * 4                       # f32 x (cast in-kernel)
    w1_tiles = 2 * d_model * th * compute_itemsize
    w2_tiles = 2 * th * d_model * compute_itemsize
    b1_tiles = 2 * 8 * th * 4                            # (1, th) pads to 8 sublanes
    b2_tiles = 2 * 8 * d_model * 4
    out_tiles = 2 * tm * d_model * out_itemsize
    acc = tm * d_model * 4
    h = tm * th * 4                                      # f32 fc1 intermediate
    return x_tiles + w1_tiles + w2_tiles + b1_tiles + b2_tiles + out_tiles + acc + h


def ffn_kernel(x_ref, w1_ref, b1_ref, w2_ref, b2_ref, o_ref, acc_ref):
    # x_ref:  (tm, d_model)   f32 (cast to MXU dtype in-kernel — free VPU filler)
    # w1_ref: (d_model, th)   compute dtype (bf16)
    # b1_ref: (1, th)         f32
    # w2_ref: (th, d_model)   compute dtype (bf16)
    # b2_ref: (1, d_model)    f32
    # o_ref:  (tm, d_model)   output dtype
    # acc_ref:(tm, d_model)   f32 accumulator, resident across the hidden (k) axis
    k = pl.program_id(1)

    @pl.when(k == 0)
    def _():
        acc_ref[...] = jnp.zeros_like(acc_ref)

    # fc1 chunk + bias + ReLU with f32 accumulation / elementwise.
    h = jnp.dot(x_ref[...].astype(w1_ref.dtype), w1_ref[...],
                preferred_element_type=jnp.float32)
    h = jnp.maximum(h + b1_ref[...], 0.0)

    # fc2 partial contribution of this hidden chunk.
    acc_ref[...] += jnp.dot(h.astype(w2_ref.dtype), w2_ref[...],
                            preferred_element_type=jnp.float32)

    @pl.when(k == pl.num_programs(1) - 1)
    def _():
        # TODO(synk): training-mode dropout (pltpu.prng_seed/prng_random_bits
        # mask + 1/(1-p) scaling) not implemented; eval-mode identity dropout.
        o_ref[...] = (acc_ref[...] + b2_ref[...]).astype(o_ref.dtype)


@functools.partial(
    jax.jit,
    static_argnames=("tm", "th", "n_m_tiles", "hidden_pad", "compute_dtype",
                     "vmem_limit"))
def _ffn_pallas(x, w1, b1, w2, b2, *, tm, th, n_m_tiles, hidden_pad,
                compute_dtype, vmem_limit):
    *lead, d_model = x.shape
    hidden = w1.shape[1]
    m = math.prod(lead)
    m_pad = tm * n_m_tiles
    out_dtype = x.dtype
    compute_itemsize = jnp.dtype(compute_dtype).itemsize

    # x stays f32 in HBM (bf16 cast is done in-kernel); only pad rows if needed.
    x2 = x.reshape(m, d_model)
    if m_pad != m:
        x2 = jnp.pad(x2, ((0, m_pad - m), (0, 0)))

    # Weights cast once to the MXU dtype (they are re-read per M tile, so
    # halving their HBM footprint is the right trade). Biases stay f32.
    w1c = w1.astype(compute_dtype)
    w2c = w2.astype(compute_dtype)
    b1f = jnp.reshape(b1, (1, -1)).astype(jnp.float32)
    b2f = jnp.reshape(b2, (1, -1)).astype(jnp.float32)
    if hidden_pad != hidden:
        # Zero-padded hidden columns/rows contribute exactly 0: relu(x@0 + 0)=0.
        w1c = jnp.pad(w1c, ((0, 0), (0, hidden_pad - hidden)))
        b1f = jnp.pad(b1f, ((0, 0), (0, hidden_pad - hidden)))
        w2c = jnp.pad(w2c, ((0, hidden_pad - hidden), (0, 0)))

    grid = (n_m_tiles, hidden_pad // th)

    cost = pl.CostEstimate(
        flops=int(4 * m_pad * d_model * hidden_pad),          # two matmuls
        transcendentals=0,
        bytes_accessed=int(
            m_pad * d_model * 4                               # x (f32, once)
            + n_m_tiles * 2 * d_model * hidden_pad * compute_itemsize  # W1+W2 per M tile
            + n_m_tiles * (hidden_pad + d_model) * 4          # biases per M tile
            + m_pad * d_model * jnp.dtype(out_dtype).itemsize),
    )

    out = pl.pallas_call(
        ffn_kernel,
        out_shape=jax.ShapeDtypeStruct((m_pad, d_model), out_dtype),
        grid_spec=pltpu.PrefetchScalarGridSpec(
            num_scalar_prefetch=0,
            grid=grid,
            in_specs=[
                pl.BlockSpec((tm, d_model), lambda i, k: (i, 0)),   # x tile
                pl.BlockSpec((d_model, th), lambda i, k: (0, k)),   # W1 chunk
                pl.BlockSpec((1, th), lambda i, k: (0, k)),         # b1 chunk
                pl.BlockSpec((th, d_model), lambda i, k: (k, 0)),   # W2 chunk
                pl.BlockSpec((1, d_model), lambda i, k: (0, 0)),    # b2
            ],
            out_specs=pl.BlockSpec((tm, d_model), lambda i, k: (i, 0)),
            scratch_shapes=[pltpu.VMEM((tm, d_model), jnp.float32)],
        ),
        compiler_params=pltpu.CompilerParams(
            dimension_semantics=("parallel", "arbitrary"),
            vmem_limit_bytes=vmem_limit),
        cost_estimate=cost,
    )(x2, w1c, b1f, w2c, b2f)

    return out[:m].reshape(*lead, d_model)


def positionwise_ff(x, w1, b1, w2, b2, *, compute_dtype=jnp.bfloat16):
    """Forward of PositionWiseFeedForward (eval-mode dropout = identity).

    x: (..., d_model); w1: (d_model, hidden); w2: (hidden, d_model);
    b1/b2 may be 1-D or (1, N). Weights are stored transposed vs. PyTorch
    fc.weight (i.e. (in_features, out_features)).
    """
    d_model = x.shape[-1]
    hidden = w1.shape[1]
    m = math.prod(x.shape[:-1])
    cfg = _chip_config()
    compute_itemsize = jnp.dtype(compute_dtype).itemsize
    out_itemsize = jnp.dtype(x.dtype).itemsize

    # Hidden chunk: always lane-aligned (multiple of 128); hidden is
    # zero-padded up to a multiple of the chunk, never taken whole.
    th = min(cfg["th"], _round_up(hidden, 128))

    # Row tile: per-generation target, shrunk until the double-buffered
    # working set fits the per-chip VMEM cap; then the hidden chunk if still
    # too big (huge-d_model edge case).
    tm_target = cfg["tm"]
    while (tm_target > 128 and
           _vmem_budget_bytes(tm_target, th, d_model, out_itemsize,
                              compute_itemsize) > cfg["vmem_cap"]):
        tm_target -= 128
    while (th > 128 and
           _vmem_budget_bytes(tm_target, th, d_model, out_itemsize,
                              compute_itemsize) > cfg["vmem_cap"]):
        th = max(128, (th // 2 // 128) * 128)
    hidden_pad = _round_up(hidden, th)

    # M tiling: balance tile sizes (minimizes padded rows) and keep >=2 tiles
    # on 2-TensorCore parts so the "parallel" axis shards across both cores.
    n_m_tiles = max(1, _cdiv(m, tm_target))
    if n_m_tiles < cfg["min_m_tiles"] and m > 256:
        n_m_tiles = cfg["min_m_tiles"]
    tm = _round_up(_cdiv(m, n_m_tiles), 16)

    budget = _vmem_budget_bytes(tm, th, d_model, out_itemsize, compute_itemsize)
    vmem_limit = int(max(32 * _MIB, budget + budget // 16 + 2 * _MIB))

    return _ffn_pallas(x, w1, b1, w2, b2, tm=tm, th=th, n_m_tiles=n_m_tiles,
                       hidden_pad=hidden_pad, compute_dtype=compute_dtype,
                       vmem_limit=vmem_limit)


def init_params(key, d_model, hidden_dim, dtype=jnp.float32):
    """Deterministic init mimicking nn.Linear default (uniform +/- 1/sqrt(fan_in))."""
    k1, k2, k3, k4 = jax.random.split(key, 4)
    bound1 = 1.0 / (d_model ** 0.5)
    bound2 = 1.0 / (hidden_dim ** 0.5)
    # stored transposed relative to PyTorch fc.weight: (in_features, out_features)
    w1 = jax.random.uniform(k1, (d_model, hidden_dim), dtype, -bound1, bound1)
    b1 = jax.random.uniform(k2, (1, hidden_dim), dtype, -bound1, bound1)
    w2 = jax.random.uniform(k3, (hidden_dim, d_model), dtype, -bound2, bound2)
    b2 = jax.random.uniform(k4, (1, d_model), dtype, -bound2, bound2)
    return w1, b1, w2, b2


if __name__ == "__main__":
    key = jax.random.PRNGKey(0)
    batch, seq, d_model, hidden_dim = 2, 8, 32, 64

    kx, kp = jax.random.split(key)
    x = jax.random.normal(kx, (batch, seq, d_model), jnp.float32)
    w1, b1, w2, b2 = init_params(kp, d_model, hidden_dim)

    out = positionwise_ff(x, w1, b1, w2, b2)
    out = jax.block_until_ready(out)

    # Pure-JAX reference with matching bf16 matmul operands / f32 accumulation.
    x2 = x.reshape(-1, d_model)
    h_ref = jnp.dot(x2.astype(jnp.bfloat16), w1.astype(jnp.bfloat16),
                    preferred_element_type=jnp.float32) + b1
    h_ref = jnp.maximum(h_ref, 0.0)
    ref = jnp.dot(h_ref.astype(jnp.bfloat16), w2.astype(jnp.bfloat16),
                  preferred_element_type=jnp.float32) + b2
    ref = ref.reshape(batch, seq, d_model).astype(x.dtype)

    assert out.shape == (batch, seq, d_model)
    assert jnp.allclose(out, ref, atol=2e-2, rtol=2e-2), float(
        jnp.max(jnp.abs(out - ref)))

    print("KERNEL_OK")
</pallas_src>

<mosaic_0001>
module attributes {stable_mosaic.version = 11 : i64} {
  func.func @ffn_kernel(%arg0: i32, %arg1: i32, %arg2: memref<16x32xf32, #tpu.memory_space<vmem>>, %arg3: memref<32x128xbf16, #tpu.memory_space<vmem>>, %arg4: memref<1x128xf32, #tpu.memory_space<vmem>>, %arg5: memref<128x32xbf16, #tpu.memory_space<vmem>>, %arg6: memref<1x32xf32, #tpu.memory_space<vmem>>, %arg7: memref<16x32xf32, #tpu.memory_space<vmem>>, %arg8: memref<16x32xf32, #tpu.memory_space<vmem>>) attributes {dimension_semantics = [#tpu.dimension_semantics<parallel>, #tpu.dimension_semantics<arbitrary>], iteration_bounds = array<i64: 1, 1>, scalar_prefetch = 0 : i64, scratch_operands = 1 : i64, tpu.core_type = #tpu.core_type<tc>, window_params = [{transform_indices = @transform_0, window_bounds = array<i64: 16, 32>}, {transform_indices = @transform_1, window_bounds = array<i64: 32, 128>}, {transform_indices = @transform_2, window_bounds = array<i64: 1, 128>}, {transform_indices = @transform_3, window_bounds = array<i64: 128, 32>}, {pipeline_mode = #tpu.pipeline_mode<synchronous>, transform_indices = @transform_4, window_bounds = array<i64: 1, 32>}, {transform_indices = @transform_5, window_bounds = array<i64: 16, 32>}]} {
    %c0_i32 = arith.constant 0 : i32
    %0 = arith.cmpi eq, %arg1, %c0_i32 : i32
    %1 = arith.extui %0 : i1 to i32
    %c0_i32_0 = arith.constant 0 : i32
    %2 = arith.cmpi ne, %1, %c0_i32_0 : i32
    scf.if %2 {
      %cst_16 = arith.constant 0.000000e+00 : f32
      %21 = vector.broadcast %cst_16 : f32 to vector<16x32xf32>
      %c0_17 = arith.constant 0 : index
      %c0_18 = arith.constant 0 : index
      %22 = vector.load %arg8[%c0_17, %c0_18] : memref<16x32xf32, #tpu.memory_space<vmem>>, vector<16x32xf32>
      tpu.vector_store %arg8[%c0_17, %c0_18], %21 {strides = array<i32>} : memref<16x32xf32, #tpu.memory_space<vmem>>, vector<16x32xf32>,
    } else {
    }
    %c0 = arith.constant 0 : index
    %c0_1 = arith.constant 0 : index
    %3 = vector.load %arg2[%c0, %c0_1] : memref<16x32xf32, #tpu.memory_space<vmem>>, vector<16x32xf32>
    %4 = arith.truncf %3 : vector<16x32xf32> to vector<16x32xbf16>
    %c0_2 = arith.constant 0 : index
    %c0_3 = arith.constant 0 : index
    %5 = vector.load %arg3[%c0_2, %c0_3] : memref<32x128xbf16, #tpu.memory_space<vmem>>, vector<32x128xbf16>
    %cst = arith.constant dense<0.000000e+00> : vector<16x128xf32>
    %6 = tpu.matmul %4, %5, %cst {dimension_numbers = #tpu.dot_dimension_numbers<[1], [0], [0], [1], [0, 0, 1, 1], [], []>} : vector<16x32xbf16>, vector<32x128xbf16>, vector<16x128xf32> -> vector<16x128xf32>
    %c0_4 = arith.constant 0 : index
    %c0_5 = arith.constant 0 : index
    %7 = vector.load %arg4[%c0_4, %c0_5] : memref<1x128xf32, #tpu.memory_space<vmem>>, vector<1x128xf32>
    %8 = vector.broadcast %7 : vector<1x128xf32> to vector<16x128xf32>
    %9 = arith.addf %6, %8 : vector<16x128xf32>
    %cst_6 = arith.constant 0.000000e+00 : f32
    %10 = vector.broadcast %cst_6 : f32 to vector<16x128xf32>
    %11 = arith.maximumf %9, %10 : vector<16x128xf32>
    %c0_7 = arith.constant 0 : index
    %c0_8 = arith.constant 0 : index
    %12 = vector.load %arg8[%c0_7, %c0_8] : memref<16x32xf32, #tpu.memory_space<vmem>>, vector<16x32xf32>
    %13 = arith.truncf %11 : vector<16x128xf32> to vector<16x128xbf16>
    %c0_9 = arith.constant 0 : index
    %c0_10 = arith.constant 0 : index
    %14 = vector.load %arg5[%c0_9, %c0_10] : memref<128x32xbf16, #tpu.memory_space<vmem>>, vector<128x32xbf16>
    %cst_11 = arith.constant dense<0.000000e+00> : vector<16x32xf32>
    %15 = tpu.matmul %13, %14, %cst_11 {dimension_numbers = #tpu.dot_dimension_numbers<[1], [0], [0], [1], [0, 0, 1, 1], [], []>} : vector<16x128xbf16>, vector<128x32xbf16>, vector<16x32xf32> -> vector<16x32xf32>
    %16 = arith.addf %12, %15 : vector<16x32xf32>
    %c0_12 = arith.constant 0 : index
    %c0_13 = arith.constant 0 : index
    %17 = vector.load %arg8[%c0_12, %c0_13] : memref<16x32xf32, #tpu.memory_space<vmem>>, vector<16x32xf32>
    tpu.vector_store %arg8[%c0_12, %c0_13], %16 {strides = array<i32>} : memref<16x32xf32, #tpu.memory_space<vmem>>, vector<16x32xf32>,
    %c0_i32_14 = arith.constant 0 : i32
    %18 = arith.cmpi eq, %arg1, %c0_i32_14 : i32
    %19 = arith.extui %18 : i1 to i32
    %c0_i32_15 = arith.constant 0 : i32
    %20 = arith.cmpi ne, %19, %c0_i32_15 : i32
    scf.if %20 {
      %c0_16 = arith.constant 0 : index
      %c0_17 = arith.constant 0 : index
      %21 = vector.load %arg8[%c0_16, %c0_17] : memref<16x32xf32, #tpu.memory_space<vmem>>, vector<16x32xf32>
      %c0_18 = arith.constant 0 : index
      %c0_19 = arith.constant 0 : index
      %22 = vector.load %arg6[%c0_18, %c0_19] : memref<1x32xf32, #tpu.memory_space<vmem>>, vector<1x32xf32>
      %23 = vector.broadcast %22 : vector<1x32xf32> to vector<16x32xf32>
      %24 = arith.addf %21, %23 : vector<16x32xf32>
      %c0_20 = arith.constant 0 : index
      %c0_21 = arith.constant 0 : index
      %25 = vector.load %arg7[%c0_20, %c0_21] : memref<16x32xf32, #tpu.memory_space<vmem>>, vector<16x32xf32>
      tpu.vector_store %arg7[%c0_20, %c0_21], %24 {strides = array<i32>} : memref<16x32xf32, #tpu.memory_space<vmem>>, vector<16x32xf32>,
    } else {
    }
    return
  }
  func.func @transform_0(%arg0: i32, %arg1: i32) -> (i32, i32) {
    %c0_i32 = arith.constant 0 : i32
    %c0_i32_0 = arith.constant 0 : i32
    return %arg0, %c0_i32 : i32, i32
  }
  func.func @transform_1(%arg0: i32, %arg1: i32) -> (i32, i32) {
    %c0_i32 = arith.constant 0 : i32
    %c0_i32_0 = arith.constant 0 : i32
    return %c0_i32, %arg1 : i32, i32
  }
  func.func @transform_2(%arg0: i32, %arg1: i32) -> (i32, i32) {
    %c0_i32 = arith.constant 0 : i32
    %c0_i32_0 = arith.constant 0 : i32
    return %c0_i32, %arg1 : i32, i32
  }
  func.func @transform_3(%arg0: i32, %arg1: i32) -> (i32, i32) {
    %c0_i32 = arith.constant 0 : i32
    %c0_i32_0 = arith.constant 0 : i32
    return %arg1, %c0_i32 : i32, i32
  }
  func.func @transform_4(%arg0: i32, %arg1: i32) -> (i32, i32) {
    %c0_i32 = arith.constant 0 : i32
    %c0_i32_0 = arith.constant 0 : i32
    %c0_i32_1 = arith.constant 0 : i32
    return %c0_i32, %c0_i32_0 : i32, i32
  }
  func.func @transform_5(%arg0: i32, %arg1: i32) -> (i32, i32) {
    %c0_i32 = arith.constant 0 : i32
    %c0_i32_0 = arith.constant 0 : i32
    return %arg0, %c0_i32 : i32, i32
  }
}

</mosaic_0001>

<llo_original>
// kernel: _ffn_pallas.1
$region0: #{_ffn_pallas.1}
  #allocation0 [shape = 'u32[]', space=smem, size = 0x4, offset = 0x4, fixed_abs, tag = 'smem constant byte address 0x4 - core index']
  #allocation1 [shape = 'u32[144,128]{1,0:T(1,128)}', space=vmem, size = 0x12000, scoped, tag = 'internal scratch']
  #allocation2 [shape = 'f32[16,32]{1,0:T(8,128)}', space=vmem, size = 0x2000, scoped, tag = 'scratch operand']
  %s0 = inlined_call_operand.vmem [shape: f32[16,32], index: 0, kind: input, shape index: {}]
  %s1 = inlined_call_operand.vmem [shape: bf16[32,128], index: 1, kind: input, shape index: {}]
  %s2 = inlined_call_operand.vmem [shape: f32[1,128], index: 2, kind: input, shape index: {}]
  %s3 = inlined_call_operand.vmem [shape: bf16[128,32], index: 3, kind: input, shape index: {}]
  %s4 = inlined_call_operand.vmem [shape: f32[1,32], index: 4, kind: input, shape index: {}]
  %s5 = inlined_call_operand.hbm [shape: f32[16,32], index: 5, kind: output, shape index: {}]
  %s6 = sld [smem:[#allocation0]]
  $region38: #{_ffn_pallas.1} parent=0
    _
  %s8 = ssub.s32 1, %s6
  %s9 = scalar_select 0, %s8, %s6
  $region1: #{_ffn_pallas.1} parent=0
    #allocation3 [shape = 'u8[8192]{0}', space=vmem, size = 0x2000, scoped, tag = 'output window, operand 0, single buffered']
    #allocation4 [shape = 's32[1]{0}', space=sflag, size = 0x4, scoped, tag = 'scoped memory for _ffn_pallas.1']
    %10 = vsyncpa [#allocation4], 0
    // Predicated region
    $region2: #{_ffn_pallas.1} parent=1 // pred_check
      _
    $region3: #{_ffn_pallas.1} parent=1 // pred_check_branch
      %12 = sbr.rel (0) target = $region5
    $region4: #{_ffn_pallas.1} parent=1 // pred_region
      _
    $region5: #{_ffn_pallas.1} parent=1 // pred_fallthru
      _
    // Predicated region
    $region6: #{_ffn_pallas.1} parent=1 // pred_check
      _
    $region7: #{_ffn_pallas.1} parent=1 // pred_check_branch
      %14 = sbr.rel (0) target = $region9
    $region8: #{_ffn_pallas.1} parent=1 // pred_region
      _
    $region9: #{_ffn_pallas.1} parent=1 // pred_fallthru
      _
    // Predicated region
    $region10: #{_ffn_pallas.1} parent=1 // pred_check
      _
    $region11: #{_ffn_pallas.1} parent=1 // pred_check_branch
      %16 = sbr.rel (0) target = $region13
    $region12: #{_ffn_pallas.1} parent=1 // pred_region
      _
    $region13: #{_ffn_pallas.1} parent=1 // pred_fallthru
      _
    // Predicated region
    $region14: #{_ffn_pallas.1} parent=1 // pred_check
      _
    $region15: #{_ffn_pallas.1} parent=1 // pred_check_branch
      %18 = sbr.rel (0) target = $region17
    $region16: #{_ffn_pallas.1} parent=1 // pred_region
      _
    $region17: #{_ffn_pallas.1} parent=1 // pred_fallthru
      _
    // Predicated region
    $region18: #{_ffn_pallas.1} parent=1 // pred_check
      _
    $region19: #{_ffn_pallas.1} parent=1 // pred_check_branch
      %20 = sbr.rel (0) target = $region21
    $region20: #{_ffn_pallas.1} parent=1 // pred_region
      _
    $region21: #{_ffn_pallas.1} parent=1 // pred_fallthru
      _
    %p22 = scmp.eq.s32.totalorder 0, 0
    // Predicated region
    $region22: #{_ffn_pallas.1} parent=1 // pred_check
      %p23 = pneg %p22
    $region23: #{_ffn_pallas.1} parent=1 // pred_check_branch
      %25 = sbr.rel (%p23) target = $region25
    $region24: #{_ffn_pallas.1} parent=1 // pred_region
      %vm26 = vcmask 261120
      %27 = vst.msk [vmem:[#allocation2] sm:$0xff] %vm26, 0.0
      %28 = vst.msk [vmem:[#allocation2 + $0x8] sm:$0xff] %vm26, 0.0
    $region25: #{_ffn_pallas.1} parent=1 // pred_fallthru
      _
    %v29 = vld [vmem:[%s0] sm:$0xff]
    %v30 = vld [vmem:[%s0 + $0x8] sm:$0xff]
    %v31 = vpack.c.bf16 %v30, %v29
    %v32 = vld [vmem:[%s1] sm:$0xf]
    %v33 = vld [vmem:[%s1 + $0x4] sm:$0xf]
    %v34 = vld [vmem:[%s1 + $0x8] sm:$0xf]
    %v35 = vld [vmem:[%s1 + $0xc] sm:$0xf]
    %v36 = vld [vmem:[%s2] sm:$0x1]
    %v38 = vlaneseq
    %v39 = vshrl.u32 %v38, 7
    %v40 = vsub.s32 0, %v39
    %v41 = vrot.slane %v36, %v40
    %v47 = vunpack.c.l.b16 %v32
    %v48 = vunpack.c.l.b16 %v33
    %v49 = vunpack.c.l.b16 %v34
    %v50 = vunpack.c.l.b16 %v35
    %v51 = vpack.c.b16 %v48, %v47
    %v52 = vpack.c.b16 %v50, %v49
    %vm55 = vcmask 261120
    %v57 = vsel %vm55, %v31, 0
    %59 = vmatprep.subr.bf16.mxu0 0
    %60 = vmatpush1.bf16.msra.mxu0 0
    %61 = vmatprep.subr.bf16.mxu0 0
    %62 = vmatpush1.bf16.msra.mxu0 0
    %63 = vmatprep.subr.bf16.mxu0 0
    %64 = vmatpush1.bf16.msra.mxu0 0
    %65 = vmatprep.subr.bf16.mxu0 0
    %66 = vmatpush1.bf16.msra.mxu0 0
    %67 = vmatprep.subr.bf16.mxu0 0
    %68 = vmatpush1.bf16.msra.mxu0 0
    %69 = vmatprep.subr.bf16.mxu0 0
    %70 = vmatpush1.bf16.msra.mxu0 0
    %71 = vmatprep.subr.bf16.mxu0 0
    %72 = vmatpush1.bf16.msra.mxu0 %v52
    %73 = vmatprep.subr.bf16.mxu0 0
    %74 = vmatpush1.bf16.msra.mxu0 %v51
    %75 = vmatprep.subr.bf16.mxu0 0
    %76 = vmatpush2.bf16.msra.mxu0 0
    %77 = vmatprep.subr.bf16.mxu0 0
    %78 = vmatpush2.bf16.msra.mxu0 0
    %79 = vmatprep.subr.bf16.mxu0 0
    %80 = vmatpush2.bf16.msra.mxu0 0
    %81 = vmatprep.subr.bf16.mxu0 0
    %82 = vmatpush2.bf16.msra.mxu0 0
    %83 = vmatprep.subr.bf16.mxu0 0
    %84 = vmatpush2.bf16.msra.mxu0 0
    %85 = vmatprep.subr.bf16.mxu0 0
    %86 = vmatpush2.bf16.msra.mxu0 0
    %87 = vmatprep.subr.bf16.mxu0 0
    %88 = vmatpush2.bf16.msra.mxu0 0
    %89 = vmatprep.subr.bf16.mxu0 0
    %90 = vmatpush2.bf16.msra.mxu0 0
    %91 = vmatprep.mubr.bf16.mxu0 0
    %92 = vmatmul.mubr.bf16.gmra.mxu0 %v57
    %v93 = vpop.f32.mrf.mxu0
    %v94 = vadd.f32 %v41, %v93
    %v95 = vpop.f32.mrf.mxu0
    %v96 = vpop.f32.mrf.mxu0
    %v97 = vadd.f32 %v41, %v96
    %v98 = vpop.f32.mrf.mxu0
    %99 = vdwg.mxu0
    %v100 = vmax.f32 %v94, 0.0
    %v101 = vmax.f32 %v97, 0.0
    %v102 = vld [vmem:[#allocation2] sm:$0xff]
    %v103 = vld [vmem:[#allocation2 + $0x8] sm:$0xff]
    %v104 = vpack.c.bf16 %v101, %v100
    %v105 = vld [vmem:[%s3] sm:$0xf]
    %v106 = vld [vmem:[%s3 + $0x4] sm:$0xf]
    %v107 = vld [vmem:[%s3 + $0x8] sm:$0xf]
    %v108 = vld [vmem:[%s3 + $0xc] sm:$0xf]
    %v109 = vld [vmem:[%s3 + $0x10] sm:$0xf]
    %v110 = vld [vmem:[%s3 + $0x14] sm:$0xf]
    %v111 = vld [vmem:[%s3 + $0x18] sm:$0xf]
    %v112 = vld [vmem:[%s3 + $0x1c] sm:$0xf]
    %v113 = vld [vmem:[%s3 + $0x20] sm:$0xf]
    %v114 = vld [vmem:[%s3 + $0x24] sm:$0xf]
    %v115 = vld [vmem:[%s3 + $0x28] sm:$0xf]
    %v116 = vld [vmem:[%s3 + $0x2c] sm:$0xf]
    %v117 = vld [vmem:[%s3 + $0x30] sm:$0xf]
    %v118 = vld [vmem:[%s3 + $0x34] sm:$0xf]
    %v119 = vld [vmem:[%s3 + $0x38] sm:$0xf]
    %v120 = vld [vmem:[%s3 + $0x3c] sm:$0xf]
    %v137 = vunpack.c.l.b16 %v105
    %v138 = vunpack.c.l.b16 %v106
    %v139 = vunpack.c.l.b16 %v107
    %v140 = vunpack.c.l.b16 %v108
    %v141 = vunpack.c.l.b16 %v109
    %v142 = vunpack.c.l.b16 %v110
    %v143 = vunpack.c.l.b16 %v111
    %v144 = vunpack.c.l.b16 %v112
    %v145 = vunpack.c.l.b16 %v113
    %v146 = vunpack.c.l.b16 %v114
    %v147 = vunpack.c.l.b16 %v115
    %v148 = vunpack.c.l.b16 %v116
    %v149 = vunpack.c.l.b16 %v117
    %v150 = vunpack.c.l.b16 %v118
    %v151 = vunpack.c.l.b16 %v119
    %v152 = vunpack.c.l.b16 %v120
    %v153 = vpack.c.b16 %v138, %v137
    %v154 = vpack.c.b16 %v140, %v139
    %v155 = vpack.c.b16 %v142, %v141
    %v156 = vpack.c.b16 %v144, %v143
    %v157 = vpack.c.b16 %v146, %v145
    %v158 = vpack.c.b16 %v148, %v147
    %v159 = vpack.c.b16 %v150, %v149
    %v160 = vpack.c.b16 %v152, %v151
    %169 = vmatprep.subr.bf16.mxu0 0
    %170 = vmatpush1.bf16.msra.mxu0 %v160
    %171 = vmatprep.subr.bf16.mxu0 0
    %172 = vmatpush1.bf16.msra.mxu0 %v159
    %173 = vmatprep.subr.bf16.mxu0 0
    %174 = vmatpush1.bf16.msra.mxu0 %v158
    %175 = vmatprep.subr.bf16.mxu0 0
    %176 = vmatpush1.bf16.msra.mxu0 %v157
    %177 = vmatprep.subr.bf16.mxu0 0
    %178 = vmatpush1.bf16.msra.mxu0 %v156
    %179 = vmatprep.subr.bf16.mxu0 0
    %180 = vmatpush1.bf16.msra.mxu0 %v155
    %181 = vmatprep.subr.bf16.mxu0 0
    %182 = vmatpush1.bf16.msra.mxu0 %v154
    %183 = vmatprep.subr.bf16.mxu0 0
    %184 = vmatpush1.bf16.msra.mxu0 %v153
    %185 = vmatprep.subr.bf16.mxu0 0
    %186 = vmatpush2.bf16.msra.mxu0 0
    %187 = vmatprep.subr.bf16.mxu0 0
    %188 = vmatpush2.bf16.msra.mxu0 0
    %189 = vmatprep.subr.bf16.mxu0 0
    %190 = vmatpush2.bf16.msra.mxu0 0
    %191 = vmatprep.subr.bf16.mxu0 0
    %192 = vmatpush2.bf16.msra.mxu0 0
    %193 = vmatprep.subr.bf16.mxu0 0
    %194 = vmatpush2.bf16.msra.mxu0 0
    %195 = vmatprep.subr.bf16.mxu0 0
    %196 = vmatpush2.bf16.msra.mxu0 0
    %197 = vmatprep.subr.bf16.mxu0 0
    %198 = vmatpush2.bf16.msra.mxu0 0
    %199 = vmatprep.subr.bf16.mxu0 0
    %200 = vmatpush2.bf16.msra.mxu0 0
    %201 = vmatprep.mubr.bf16.mxu0 0
    %202 = vmatmul.mubr.bf16.gmra.mxu0 %v104
    %v203 = vpop.f32.mrf.mxu0
    %v204 = vadd.f32 0.0, %v203
    %v205 = vpop.f32.mrf.mxu0
    %v206 = vpop.f32.mrf.mxu0
    %v207 = vadd.f32 0.0, %v206
    %v208 = vpop.f32.mrf.mxu0
    %209 = vdwg.mxu0
    %v210 = vadd.f32 %v102, %v204
    %v211 = vadd.f32 %v103, %v207
    %212 = vst.msk [vmem:[#allocation2] sm:$0xff] %vm55, %v210
    %213 = vst.msk [vmem:[#allocation2 + $0x8] sm:$0xff] %vm55, %v211
    // Predicated region
    $region26: #{_ffn_pallas.1} parent=1 // pred_check
      %p214 = pneg %p22
    $region27: #{_ffn_pallas.1} parent=1 // pred_check_branch
      %216 = sbr.rel (%p214) target = $region29
    $region28: #{_ffn_pallas.1} parent=1 // pred_region
      %v217 = vld [vmem:[#allocation2] sm:$0xff]
      %v218 = vld [vmem:[#allocation2 + $0x8] sm:$0xff]
      %v219 = vld [vmem:[%s4] sm:$0x1]
      %v221 = vlaneseq
      %v222 = vshrl.u32 %v221, 7
      %v223 = vsub.s32 0, %v222
      %v224 = vrot.slane %v219, %v223
      %v226 = vadd.f32 %v217, %v224
      %v227 = vadd.f32 %v218, %v224
      %228 = vst.msk [vmem:[#allocation3] sm:$0xff] %vm55, %v226
      %229 = vst.msk [vmem:[#allocation3 + $0x8] sm:$0xff] %vm55, %v227
    $region29: #{_ffn_pallas.1} parent=1 // pred_fallthru
      _
    // Predicated region
    $region30: #{_ffn_pallas.1} parent=1 // pred_check
      _
    $region31: #{_ffn_pallas.1} parent=1 // pred_check_branch
      %231 = sbr.rel (0) target = $region33
    $region32: #{_ffn_pallas.1} parent=1 // pred_region
      %s233 = ssub.s32 256, 256
      %234 = vsyncadd [#allocation4], %s233
      %s235 = sshll.u32 [#allocation3], 4
      %s236 = int_to_ptr.vmem [resolvable:$true] %s235
      %241 = dma.vmem_to_hbm [thread:$0]  %s236, 256, %s5, [#allocation4], 128, 128, 8
    $region33: #{_ffn_pallas.1} parent=1 // pred_fallthru
      _
    // Predicated region
    $region34: #{_ffn_pallas.1} parent=1 // pred_check
      _
    $region35: #{_ffn_pallas.1} parent=1 // pred_check_branch
      %243 = sbr.rel (0) target = $region37
    $region36: #{_ffn_pallas.1} parent=1 // pred_region
      %244 = dma.done [#allocation4], 256
    $region37: #{_ffn_pallas.1} parent=1 // pred_fallthru
      _
    %245 = vsyncpa [#allocation4], 1

</llo_original>
